<compile_context>
chip_gen: v5e
topology: v5e:2x2
jax: 0.10.0
libtpu: 0.0.40
codegen_flags: <defaults>
</compile_context>

<pallas_src>
import functools

import jax
import jax.numpy as jnp
from jax.experimental import pallas as pl
from jax.experimental.pallas import tpu as pltpu

_LANES = 128
_SUBLANES = 8
_MAX_TILE_ROWS = 1024  # (1024,128) f32 block: 2 inputs x 2 buffers = 2 MiB VMEM


def _round_up(x, m):
    return ((x + m - 1) // m) * m


def _sumsq_kernel(yhat_ref, y_ref, o_ref, *, tile_rows, total_rows,
                  tiles_per_split, needs_mask):
    """Accumulate sum((yhat - y)^2) for this split's row range into o_ref."""
    c = pl.program_id(0)   # split / core index       ("parallel")
    i = pl.program_id(1)   # row-tile index in split  ("arbitrary")

    @pl.when(i == 0)
    def _():
        o_ref[...] = jnp.zeros_like(o_ref)

    a = yhat_ref[...]
    b = y_ref[...]
    if a.dtype != jnp.float32:
        a = a.astype(jnp.float32)
    if b.dtype != jnp.float32:
        b = b.astype(jnp.float32)
    d = a - b
    d2 = d * d

    if needs_mask:
        # Zero rows past the real extent (over-covering / clamped tiles and the
        # undefined tail of the last partial tile).  Mask before accumulating.
        tile = c * tiles_per_split + i
        row = (jax.lax.broadcasted_iota(jnp.int32, d2.shape, 0)
               + tile * tile_rows)
        d2 = jnp.where(row < total_rows, d2, 0.0)

    # VPU-only partial reduction: fold (tile_rows,128) -> (8,128) by adding
    # whole vregs; defer the single cross-lane reduce to the epilogue.
    psum = d2.reshape(tile_rows // _SUBLANES, _SUBLANES, _LANES).sum(axis=0)
    o_ref[...] = o_ref[...] + psum[None, :, :]


def rmse_loss(yhat, y, eps=1e-6):
    """JAX/Pallas equivalent of RMSELoss.forward."""
    if yhat.shape != y.shape:
        # Matches `self.mse(yhat, y.unsqueeze(1))` in PyTorch.
        # TODO(synk): express this channel broadcast through y's BlockSpec
        # index_map instead of materializing C copies of y in HBM.
        y = jnp.broadcast_to(jnp.expand_dims(y, 1), yhat.shape)

    n_elems = yhat.size

    yhat_f = jnp.ravel(yhat)
    y_f = jnp.ravel(y)

    # Lane-dense 2-D view.  When numel % 128 == 0 (common case) this is a free
    # bitcast reshape; otherwise pad <128 zeros (zero diff -> contributes 0).
    rem = n_elems % _LANES
    if rem:
        pad = _LANES - rem
        yhat_f = jnp.pad(yhat_f, (0, pad))
        y_f = jnp.pad(y_f, (0, pad))
    rows = yhat_f.size // _LANES
    yhat_2d = yhat_f.reshape(rows, _LANES)
    y_2d = y_f.reshape(rows, _LANES)

    tile_rows = min(_MAX_TILE_ROWS, _round_up(rows, _SUBLANES))
    grid_rows = pl.cdiv(rows, tile_rows)

    # Shard the row-tile range across TensorCores (2x on v7x; the "parallel"
    # axis simply iterates on single-core chips).
    num_splits = 2 if grid_rows >= 2 else 1
    tiles_per_split = pl.cdiv(grid_rows, num_splits)
    needs_mask = num_splits * tiles_per_split * tile_rows > rows
    max_tile = grid_rows - 1

    def in_index(c, i):
        # Clamp so an over-covering tile never starts past the array; its
        # contribution is zeroed by the in-kernel mask.
        return (jnp.minimum(c * tiles_per_split + i, max_tile), 0)

    kernel = functools.partial(
        _sumsq_kernel,
        tile_rows=tile_rows,
        total_rows=rows,
        tiles_per_split=tiles_per_split,
        needs_mask=needs_mask,
    )

    partial_sums = pl.pallas_call(
        kernel,
        out_shape=jax.ShapeDtypeStruct((num_splits, _SUBLANES, _LANES),
                                       jnp.float32),
        grid=(num_splits, tiles_per_split),
        in_specs=[
            pl.BlockSpec((tile_rows, _LANES), in_index),
            pl.BlockSpec((tile_rows, _LANES), in_index),
        ],
        out_specs=pl.BlockSpec((1, _SUBLANES, _LANES), lambda c, i: (c, 0, 0)),
        compiler_params=pltpu.CompilerParams(
            dimension_semantics=("parallel", "arbitrary"),
        ),
    )(yhat_2d, y_2d)

    mse = jnp.sum(partial_sums) / jnp.float32(n_elems)
    return jnp.sqrt(mse + jnp.float32(eps))


if __name__ == "__main__":
    key = jax.random.PRNGKey(0)
    k1, k2, k3 = jax.random.split(key, 3)
    eps = 1e-6

    # Case 1: same-shape branch, dense predictions (B, C, H, W).
    yhat = jax.random.normal(k1, (2, 4, 16, 16), dtype=jnp.float32)
    y = jax.random.normal(k2, (2, 4, 16, 16), dtype=jnp.float32)
    loss_same = rmse_loss(yhat, y, eps=eps)
    jax.block_until_ready(loss_same)
    ref_same = jnp.sqrt(jnp.mean((yhat - y) ** 2) + eps)
    assert jnp.allclose(loss_same, ref_same, rtol=1e-5, atol=1e-6)

    # Case 2: mismatched-shape branch -> y.unsqueeze(1) broadcast.
    y_small = jax.random.normal(k3, (2, 16, 16), dtype=jnp.float32)
    loss_bcast = rmse_loss(yhat, y_small, eps=eps)
    jax.block_until_ready(loss_bcast)
    y_b = jnp.broadcast_to(y_small[:, None], yhat.shape)
    ref_bcast = jnp.sqrt(jnp.mean((yhat - y_b) ** 2) + eps)
    assert jnp.allclose(loss_bcast, ref_bcast, rtol=1e-5, atol=1e-6)

    # Case 3: larger, non-tile-aligned input exercising masking + 2-way split.
    yhat_big = jax.random.normal(k1, (4, 8, 72, 72), dtype=jnp.float32)
    y_big = jax.random.normal(k2, (4, 8, 72, 72), dtype=jnp.float32)
    loss_big = rmse_loss(yhat_big, y_big, eps=eps)
    jax.block_until_ready(loss_big)
    ref_big = jnp.sqrt(jnp.mean((yhat_big - y_big) ** 2) + eps)
    assert jnp.allclose(loss_big, ref_big, rtol=1e-5, atol=1e-6)

    print("KERNEL_OK")
</pallas_src>

<mosaic_0001>
module attributes {stable_mosaic.version = 11 : i64} {
  func.func @_sumsq_kernel(%arg0: i32, %arg1: i32, %arg2: memref<16x128xf32, #tpu.memory_space<vmem>>, %arg3: memref<16x128xf32, #tpu.memory_space<vmem>>, %arg4: memref<1x8x128xf32, #tpu.memory_space<vmem>>) attributes {dimension_semantics = [#tpu.dimension_semantics<parallel>, #tpu.dimension_semantics<arbitrary>], iteration_bounds = array<i64: 1, 1>, scalar_prefetch = 0 : i64, scratch_operands = 0 : i64, tpu.core_type = #tpu.core_type<tc>, window_params = [{transform_indices = @transform_0, window_bounds = array<i64: 16, 128>}, {transform_indices = @transform_1, window_bounds = array<i64: 16, 128>}, {transform_indices = @transform_2, window_bounds = array<i64: 1, 8, 128>}]} {
    %c0_i32 = arith.constant 0 : i32
    %0 = arith.cmpi eq, %arg1, %c0_i32 : i32
    %1 = arith.extui %0 : i1 to i32
    %c0_i32_0 = arith.constant 0 : i32
    %2 = arith.cmpi ne, %1, %c0_i32_0 : i32
    scf.if %2 {
      %cst_10 = arith.constant 0.000000e+00 : f32
      %13 = vector.broadcast %cst_10 : f32 to vector<1x8x128xf32>
      %c0_11 = arith.constant 0 : index
      %c0_12 = arith.constant 0 : index
      %c0_13 = arith.constant 0 : index
      %14 = vector.load %arg4[%c0_11, %c0_12, %c0_13] : memref<1x8x128xf32, #tpu.memory_space<vmem>>, vector<1x8x128xf32>
      tpu.vector_store %arg4[%c0_11, %c0_12, %c0_13], %13 {strides = array<i32>} : memref<1x8x128xf32, #tpu.memory_space<vmem>>, vector<1x8x128xf32>,
    } else {
    }
    %c0 = arith.constant 0 : index
    %c0_1 = arith.constant 0 : index
    %3 = vector.load %arg2[%c0, %c0_1] : memref<16x128xf32, #tpu.memory_space<vmem>>, vector<16x128xf32>
    %c0_2 = arith.constant 0 : index
    %c0_3 = arith.constant 0 : index
    %4 = vector.load %arg3[%c0_2, %c0_3] : memref<16x128xf32, #tpu.memory_space<vmem>>, vector<16x128xf32>
    %5 = arith.subf %3, %4 : vector<16x128xf32>
    %6 = arith.mulf %5, %5 : vector<16x128xf32>
    %7 = vector.shape_cast %6 : vector<16x128xf32> to vector<2x8x128xf32>
    %cst = arith.constant dense<0.000000e+00> : vector<8x128xf32>
    %8 = vector.multi_reduction <add>, %7, %cst [0] : vector<2x8x128xf32> to vector<8x128xf32>
    %c0_4 = arith.constant 0 : index
    %c0_5 = arith.constant 0 : index
    %c0_6 = arith.constant 0 : index
    %9 = vector.load %arg4[%c0_4, %c0_5, %c0_6] : memref<1x8x128xf32, #tpu.memory_space<vmem>>, vector<1x8x128xf32>
    %10 = vector.shape_cast %8 : vector<8x128xf32> to vector<1x8x128xf32>
    %11 = arith.addf %9, %10 : vector<1x8x128xf32>
    %c0_7 = arith.constant 0 : index
    %c0_8 = arith.constant 0 : index
    %c0_9 = arith.constant 0 : index
    %12 = vector.load %arg4[%c0_7, %c0_8, %c0_9] : memref<1x8x128xf32, #tpu.memory_space<vmem>>, vector<1x8x128xf32>
    tpu.vector_store %arg4[%c0_7, %c0_8, %c0_9], %11 {strides = array<i32>} : memref<1x8x128xf32, #tpu.memory_space<vmem>>, vector<1x8x128xf32>,
    return
  }
  func.func @transform_0(%arg0: i32, %arg1: i32) -> (i32, i32) {
    %c1_i32 = arith.constant 1 : i32
    %0 = arith.muli %arg0, %c1_i32 : i32
    %1 = arith.addi %0, %arg1 : i32
    %c0_i32 = arith.constant 0 : i32
    %2 = arith.minsi %1, %c0_i32 : i32
    %c0_i32_0 = arith.constant 0 : i32
    %c0_i32_1 = arith.constant 0 : i32
    return %2, %c0_i32_0 : i32, i32
  }
  func.func @transform_1(%arg0: i32, %arg1: i32) -> (i32, i32) {
    %c1_i32 = arith.constant 1 : i32
    %0 = arith.muli %arg0, %c1_i32 : i32
    %1 = arith.addi %0, %arg1 : i32
    %c0_i32 = arith.constant 0 : i32
    %2 = arith.minsi %1, %c0_i32 : i32
    %c0_i32_0 = arith.constant 0 : i32
    %c0_i32_1 = arith.constant 0 : i32
    return %2, %c0_i32_0 : i32, i32
  }
  func.func @transform_2(%arg0: i32, %arg1: i32) -> (i32, i32, i32) {
    %c0_i32 = arith.constant 0 : i32
    %c0_i32_0 = arith.constant 0 : i32
    %c0_i32_1 = arith.constant 0 : i32
    return %arg0, %c0_i32, %c0_i32_0 : i32, i32, i32
  }
}

</mosaic_0001>

<llo_original>
// kernel: tpu_custom_call.1
$region0: #{tpu_custom_call.1}
  #allocation0 [shape = 'u32[]', space=smem, size = 0x4, offset = 0x4, fixed_abs, tag = 'smem constant byte address 0x4 - core index']
  #allocation1 [shape = 'u32[72,128]{1,0:T(1,128)}', space=vmem, size = 0x9000, scoped, tag = 'internal scratch']
  %s0 = inlined_call_operand.hbm [shape: f32[16,128], index: 0, kind: input, shape index: {}]
  %s1 = inlined_call_operand.hbm [shape: f32[16,128], index: 1, kind: input, shape index: {}]
  %s2 = inlined_call_operand.hbm [shape: f32[1,8,128], index: 2, kind: output, shape index: {}]
  %s3 = sld [smem:[#allocation0]]
  $region30: #{tpu_custom_call.1} parent=0
    _
  %s5 = ssub.s32 1, %s3
  %s6 = scalar_select 0, %s5, %s3
  $region1: #{tpu_custom_call.1} parent=0
    #allocation2 [shape = 'u8[8192]{0}', space=vmem, size = 0x2000, scoped, tag = 'input window, operand 0, single buffered']
    #allocation3 [shape = 's32[1]{0}', space=sflag, size = 0x4, scoped, tag = 'scoped memory for tpu_custom_call.1']
    #allocation4 [shape = 's32[1]{0}', space=sflag, size = 0x4, scoped, tag = 'scoped memory for tpu_custom_call.1']
    #allocation5 [shape = 'u8[8192]{0}', space=vmem, size = 0x2000, scoped, tag = 'input window, operand 1, single buffered']
    #allocation6 [shape = 's32[1]{0}', space=sflag, size = 0x4, scoped, tag = 'scoped memory for tpu_custom_call.1']
    #allocation7 [shape = 'u8[4096]{0}', space=vmem, size = 0x1000, scoped, tag = 'output window, operand 0, single buffered']
    %7 = vsyncpa [#allocation3], 0
    %8 = vsyncpa [#allocation6], 0
    %9 = vsyncpa [#allocation4], 0
    // Predicated region
    $region2: #{tpu_custom_call.1} parent=1 // pred_check
      _
    $region3: #{tpu_custom_call.1} parent=1 // pred_check_branch
      %11 = sbr.rel (0) target = $region5
    $region4: #{tpu_custom_call.1} parent=1 // pred_region
      %s12 = sadd.s32 0, 0
      %p13 = scmp.lt.s32.totalorder %s12, 0
      %s14 = scalar_select %p13, %s12, 0
      %s15 = smul.u32 2, %s14
      %17 = vsyncadd [#allocation3], 0
      %s18 = smul.addr %s15, 8
      %s19 = scalar_lea.hbm %s0, %s18
      %s20 = sshll.u32 %s19, 4
      %s21 = int_to_ptr.hbm [resolvable:$true] %s20
      %s22 = sshll.u32 [#allocation2], 4
      %s23 = int_to_ptr.vmem [resolvable:$true] %s22
      %28 = dma.hbm_to_vmem [thread:$0]  %s21, 256, %s23, [#allocation3], 128, 128, 8
    $region5: #{tpu_custom_call.1} parent=1 // pred_fallthru
      _
    // Predicated region
    $region6: #{tpu_custom_call.1} parent=1 // pred_check
      _
    $region7: #{tpu_custom_call.1} parent=1 // pred_check_branch
      %30 = sbr.rel (0) target = $region9
    $region8: #{tpu_custom_call.1} parent=1 // pred_region
      %s31 = sadd.s32 0, 0
      %p32 = scmp.lt.s32.totalorder %s31, 0
      %s33 = scalar_select %p32, %s31, 0
      %s34 = smul.u32 2, %s33
      %36 = vsyncadd [#allocation6], 0
      %s37 = smul.addr %s34, 8
      %s38 = scalar_lea.hbm %s1, %s37
      %s39 = sshll.u32 %s38, 4
      %s40 = int_to_ptr.hbm [resolvable:$true] %s39
      %s41 = sshll.u32 [#allocation5], 4
      %s42 = int_to_ptr.vmem [resolvable:$true] %s41
      %47 = dma.hbm_to_vmem [thread:$0]  %s40, 256, %s42, [#allocation6], 128, 128, 8
    $region9: #{tpu_custom_call.1} parent=1 // pred_fallthru
      _
    // Predicated region
    $region10: #{tpu_custom_call.1} parent=1 // pred_check
      _
    $region11: #{tpu_custom_call.1} parent=1 // pred_check_branch
      %49 = sbr.rel (0) target = $region13
    $region12: #{tpu_custom_call.1} parent=1 // pred_region
      %51 = dma.done [#allocation3], 256
    $region13: #{tpu_custom_call.1} parent=1 // pred_fallthru
      _
    // Predicated region
    $region14: #{tpu_custom_call.1} parent=1 // pred_check
      _
    $region15: #{tpu_custom_call.1} parent=1 // pred_check_branch
      %53 = sbr.rel (0) target = $region17
    $region16: #{tpu_custom_call.1} parent=1 // pred_region
      %55 = dma.done [#allocation6], 256
    $region17: #{tpu_custom_call.1} parent=1 // pred_fallthru
      _
    %s56 = sadd.s32 0, 0
    %p57 = scmp.lt.s32.totalorder %s56, 0
    %s58 = scalar_select %p57, %s56, 0
    %s59 = smul.u32 2, %s58
    %s60 = sadd.s32 0, 0
    %p61 = scmp.lt.s32.totalorder %s60, 0
    %s62 = scalar_select %p61, %s60, 0
    %s63 = smul.u32 2, %s62
    %p64 = scmp.eq.s32.totalorder 0, 0
    // Predicated region
    $region18: #{tpu_custom_call.1} parent=1 // pred_check
      %p65 = pneg %p64
    $region19: #{tpu_custom_call.1} parent=1 // pred_check_branch
      %67 = sbr.rel (%p65) target = $region21
    $region20: #{tpu_custom_call.1} parent=1 // pred_region
      %68 = vst [vmem:[#allocation7] sm:$0xff] 0.0
    $region21: #{tpu_custom_call.1} parent=1 // pred_fallthru
      _
    %v69 = vld [vmem:[#allocation2] sm:$0xff]
    %v70 = vld [vmem:[#allocation2 + $0x8] sm:$0xff]
    %v71 = vld [vmem:[#allocation5] sm:$0xff]
    %v72 = vld [vmem:[#allocation5 + $0x8] sm:$0xff]
    %v73 = vsub.f32 %v69, %v71
    %v74 = vsub.f32 %v70, %v72
    %v75 = vmul.f32 %v73, %v73
    %v76 = vmul.f32 %v74, %v74
    %v77 = vadd.f32 %v75, %v76
    %v78 = vld [vmem:[#allocation7] sm:$0xff]
    %v79 = vadd.f32 %v78, %v77
    %80 = vst [vmem:[#allocation7] sm:$0xff] %v79
    // Predicated region
    $region22: #{tpu_custom_call.1} parent=1 // pred_check
      _
    $region23: #{tpu_custom_call.1} parent=1 // pred_check_branch
      %82 = sbr.rel (0) target = $region25
    $region24: #{tpu_custom_call.1} parent=1 // pred_region
      %84 = vsyncadd [#allocation4], 0
      %s86 = sshll.u32 [#allocation7], 4
      %s87 = int_to_ptr.vmem [resolvable:$true] %s86
      %s88 = sshll.u32 %s2, 4
      %s89 = int_to_ptr.hbm [resolvable:$true] %s88
      %91 = dma.vmem_to_hbm [thread:$0]  %s87, 128, %s89, [#allocation4]
    $region25: #{tpu_custom_call.1} parent=1 // pred_fallthru
      _
    // Predicated region
    $region26: #{tpu_custom_call.1} parent=1 // pred_check
      _
    $region27: #{tpu_custom_call.1} parent=1 // pred_check_branch
      %93 = sbr.rel (0) target = $region29
    $region28: #{tpu_custom_call.1} parent=1 // pred_region
      %95 = dma.done [#allocation4], 128
    $region29: #{tpu_custom_call.1} parent=1 // pred_fallthru
      _
    %96 = vsyncpa [#allocation3], 1
    %97 = vsyncpa [#allocation6], 1
    %98 = vsyncpa [#allocation4], 1

</llo_original>
